<compile_context>
chip_gen: v5e
topology: v5e:2x2
jax: 0.10.0
libtpu: 0.0.40
codegen_flags: <defaults>
</compile_context>

<pallas_src>
import functools

import jax
import jax.numpy as jnp
from jax import lax
from jax.experimental import pallas as pl
from jax.experimental.pallas import tpu as pltpu


def _largest_divisor_leq(n, cap):
    cap = max(1, min(n, cap))
    for t in range(cap, 0, -1):
        if n % t == 0:
            return t
    return 1


def _vmem_budget_bytes():
    # 64 MiB scoped limit on 128-MiB parts (v5e/v6e), 32 MiB on 64-MiB parts (v7x).
    try:
        cap = pltpu.get_tpu_info().vmem_capacity_bytes
    except Exception:
        cap = 128 * 1024 * 1024
    return min(64 * 1024 * 1024, cap // 2)


def _make_im2col(x_blk, compute_dtype):
    """(TB, L, C) block -> (TB*L, 3C) circular im2col rows in compute_dtype.

    Taps: column block 0 = x[l-1], 1 = x[l], 2 = x[l+1] (circular within each
    batch, which is exactly Conv1d(padding_mode='circular') semantics).
    The trailing reshape is layout-preserving (L % 8 == 0 or TB == 1, enforced
    by the wrapper).
    """
    xm = jnp.roll(x_blk, 1, axis=1)                      # x[l-1]
    xp = jnp.roll(x_blk, -1, axis=1)                     # x[l+1]
    xc = jnp.concatenate([xm, x_blk, xp], axis=-1)       # (TB, L, 3C)
    tb, l, k = xc.shape
    return xc.reshape(tb * l, k).astype(compute_dtype)


# ---------------- pass 1: per-tile partial BatchNorm statistics --------------------
def _stats_kernel(x_ref, w_ref, psum_ref, pssq_ref, *, compute_dtype):
    xc = _make_im2col(x_ref[...], compute_dtype)
    # (rows, 3C) @ (3C, D) on the MXU, f32 accumulation.  The conv output is a
    # VMEM temporary only -- it is never written to HBM.
    y = jnp.dot(xc, w_ref[...], preferred_element_type=jnp.float32)
    s = jnp.sum(y, axis=0, keepdims=True)          # (1, D)
    q = jnp.sum(y * y, axis=0, keepdims=True)      # (1, D)
    # Each grid step owns its own (8, D) partial block (sublane-aligned), so the
    # grid axis carries no state and can be sharded across TensorCores.
    psum_ref[...] = jnp.broadcast_to(s, psum_ref.shape)
    pssq_ref[...] = jnp.broadcast_to(q, pssq_ref.shape)


# ---------------- pass 2: fused conv matmul + BatchNorm affine ---------------------
def _fused_conv_bn_kernel(x_ref, w_ref, scale_ref, shift_ref, out_ref, *, compute_dtype):
    xc = _make_im2col(x_ref[...], compute_dtype)
    y = jnp.dot(xc, w_ref[...], preferred_element_type=jnp.float32)   # (rows, D)
    y = y * scale_ref[...] + shift_ref[...]
    tb, l, d = out_ref.shape
    out_ref[...] = y.reshape(tb, l, d).astype(out_ref.dtype)


def token_embedding(x, w, b, gamma, beta, *, eps=1e-5, compute_dtype=jnp.bfloat16,
                    out_dtype=None, batches_per_tile=None):
    """Informer TokenEmbedding forward.

    x     : (B, L, c_in)
    w     : (3, c_in, d_model)  (PyTorch conv weight (d_model, c_in, 3) transposed)
    b     : (d_model,) conv bias -- cancelled exactly by the training-mode BN mean
            subtraction, so it is not used by the kernels.
    gamma : (d_model,) BatchNorm weight;  beta : (d_model,) BatchNorm bias
    compute_dtype : MXU operand dtype (bf16 default; accumulation stays f32).
    returns (B, L, d_model) with training-mode BatchNorm statistics.
    """
    del b  # cancelled exactly by the BatchNorm mean subtraction (training mode)
    B, L, C = x.shape
    D = w.shape[2]
    K = 3 * C
    M = B * L
    out_dtype = x.dtype if out_dtype is None else out_dtype
    compute_dtype = x.dtype if compute_dtype is None else compute_dtype

    vmem_limit = _vmem_budget_bytes()
    if batches_per_tile is None:
        # Keep the f32 (rows, D) in-kernel intermediates + double-buffered output
        # comfortably inside the scoped VMEM budget.
        target_rows = max(256, vmem_limit // (12 * 4 * D))
        batches_per_tile = max(1, target_rows // L)
    if L % 8 != 0:
        batches_per_tile = 1   # keep the in-kernel (TB, L, K) -> (TB*L, K) reshape layout-trivial
    TB = _largest_divisor_leq(B, batches_per_tile)   # divisor of B -> no batch padding
    nb = B // TB

    w2 = w.reshape(K, D).astype(compute_dtype)       # tiny

    cparams = pltpu.CompilerParams(dimension_semantics=("parallel",),
                                   vmem_limit_bytes=vmem_limit)

    # ---- pass 1: per-tile partial (sum, sum of squares) of the conv output ----
    stats_kernel = functools.partial(_stats_kernel, compute_dtype=compute_dtype)
    psum, pssq = pl.pallas_call(
        stats_kernel,
        out_shape=(jax.ShapeDtypeStruct((nb, 8, D), jnp.float32),
                   jax.ShapeDtypeStruct((nb, 8, D), jnp.float32)),
        grid=(nb,),
        in_specs=[pl.BlockSpec((TB, L, C), lambda i: (i, 0, 0)),   # x batch-tile
                  pl.BlockSpec((K, D), lambda i: (0, 0))],         # weights (resident)
        out_specs=(pl.BlockSpec((None, 8, D), lambda i: (i, 0, 0)),
                   pl.BlockSpec((None, 8, D), lambda i: (i, 0, 0))),
        compiler_params=cparams,
    )(x, w2)

    # ---- finalize (tiny, D-sized) in the wrapper: mean/var -> scale/shift ----
    sums = jnp.sum(psum[:, 0, :], axis=0)
    ssqs = jnp.sum(pssq[:, 0, :], axis=0)
    mean = sums / M
    var = jnp.maximum(ssqs / M - mean * mean, 0.0)    # biased (training-mode) variance
    scale = gamma.astype(jnp.float32) * lax.rsqrt(var + eps)
    shift = beta.astype(jnp.float32) - mean * scale
    scale2 = scale.reshape(1, D)
    shift2 = shift.reshape(1, D)

    # ---- pass 2: fused conv + BN affine; only the final output touches HBM ----
    fused_kernel = functools.partial(_fused_conv_bn_kernel, compute_dtype=compute_dtype)
    out = pl.pallas_call(
        fused_kernel,
        out_shape=jax.ShapeDtypeStruct((B, L, D), out_dtype),
        grid=(nb,),
        in_specs=[pl.BlockSpec((TB, L, C), lambda i: (i, 0, 0)),   # x batch-tile
                  pl.BlockSpec((K, D), lambda i: (0, 0)),          # weights (resident)
                  pl.BlockSpec((1, D), lambda i: (0, 0)),          # BN scale
                  pl.BlockSpec((1, D), lambda i: (0, 0))],         # BN shift
        out_specs=pl.BlockSpec((TB, L, D), lambda i: (i, 0, 0)),
        compiler_params=cparams,
    )(x, w2, scale2, shift2)

    return out


def token_embedding_ref(x, w, b, gamma, beta, eps=1e-5):
    """Pure-JAX reference (two-pass BN, includes the conv bias)."""
    B, L, C = x.shape
    D = w.shape[2]
    x_pad = jnp.concatenate([x[:, -1:, :], x, x[:, :1, :]], axis=1)
    acc = jnp.zeros((B, L, D), jnp.float32)
    for k in range(3):
        acc += jnp.einsum("blc,cd->bld", x_pad[:, k:k + L, :], w[k])
    acc += b
    mean = jnp.mean(acc, axis=(0, 1), keepdims=True)
    var = jnp.mean((acc - mean) ** 2, axis=(0, 1), keepdims=True)
    return (acc - mean) * lax.rsqrt(var + eps) * gamma + beta


if __name__ == "__main__":
    B, L, C_IN, D_MODEL = 2, 16, 4, 32

    key = jax.random.PRNGKey(0)
    kx, kw, kb = jax.random.split(key, 3)

    x = jax.random.normal(kx, (B, L, C_IN), dtype=jnp.float32)

    # Deterministic parameter init (synthetic; shapes match nn.Conv1d(c_in, d_model, 3))
    fan_in = C_IN * 3
    w = (jax.random.uniform(kw, (3, C_IN, D_MODEL), dtype=jnp.float32,
                            minval=-1.0, maxval=1.0) / jnp.sqrt(fan_in))
    b = (jax.random.uniform(kb, (D_MODEL,), dtype=jnp.float32,
                            minval=-1.0, maxval=1.0) / jnp.sqrt(fan_in))
    gamma = jnp.ones((D_MODEL,), jnp.float32)   # BatchNorm1d default affine init
    beta = jnp.zeros((D_MODEL,), jnp.float32)

    ref = token_embedding_ref(x, w, b, gamma, beta)

    # f32 MXU operands: tight check vs the two-pass reference (which keeps the bias,
    # validating the exact bias-cancellation argument).
    out_f32 = jax.block_until_ready(
        token_embedding(x, w, b, gamma, beta, compute_dtype=jnp.float32))
    assert out_f32.shape == (B, L, D_MODEL)
    assert jnp.allclose(out_f32, ref, atol=1e-4, rtol=1e-4), "f32 mismatch vs reference"

    # Default bf16 MXU operands (f32 accumulation): loose check.
    out_bf16 = jax.block_until_ready(token_embedding(x, w, b, gamma, beta))
    assert out_bf16.shape == (B, L, D_MODEL)
    assert jnp.allclose(out_bf16, ref, atol=3e-2, rtol=3e-2), "bf16-compute mismatch vs reference"

    # TODO(synk): BatchNorm running_mean/running_var buffer updates (training-time
    # state mutation) and an eval-mode (running-stats) BN path are not modeled;
    # the conv bias must be reinstated if an eval-mode path is ever added.

    print("KERNEL_OK")
</pallas_src>

<mosaic_0001>
module attributes {stable_mosaic.version = 11 : i64} {
  func.func @_stats_kernel(%arg0: i32, %arg1: memref<2x16x4xf32, #tpu.memory_space<vmem>>, %arg2: memref<12x32xf32, #tpu.memory_space<vmem>>, %arg3: memref<1x8x32xf32, #tpu.memory_space<vmem>>, %arg4: memref<1x8x32xf32, #tpu.memory_space<vmem>>) attributes {dimension_semantics = [#tpu.dimension_semantics<parallel>], iteration_bounds = array<i64: 1>, scalar_prefetch = 0 : i64, scratch_operands = 0 : i64, tpu.core_type = #tpu.core_type<tc>, window_params = [{transform_indices = @transform_0, window_bounds = array<i64: 2, 16, 4>}, {pipeline_mode = #tpu.pipeline_mode<synchronous>, transform_indices = @transform_1, window_bounds = array<i64: 12, 32>}, {transform_indices = @transform_2, window_bounds = array<i64: 1, 8, 32>}, {transform_indices = @transform_3, window_bounds = array<i64: 1, 8, 32>}]} {
    %c0 = arith.constant 0 : index
    %c0_0 = arith.constant 0 : index
    %c0_1 = arith.constant 0 : index
    %0 = vector.load %arg1[%c0, %c0_0, %c0_1] : memref<2x16x4xf32, #tpu.memory_space<vmem>>, vector<2x16x4xf32>
    %1 = vector.extract_strided_slice %0 {offsets = [0, 15, 0], sizes = [2, 1, 4], strides = [1, 1, 1]} : vector<2x16x4xf32> to vector<2x1x4xf32>
    %2 = vector.extract_strided_slice %0 {offsets = [0, 0, 0], sizes = [2, 15, 4], strides = [1, 1, 1]} : vector<2x16x4xf32> to vector<2x15x4xf32>
    %3 = tpu.concatenate %1, %2 in 1 : vector<2x1x4xf32>, vector<2x15x4xf32> -> vector<2x16x4xf32>
    %4 = vector.extract_strided_slice %0 {offsets = [0, 1, 0], sizes = [2, 15, 4], strides = [1, 1, 1]} : vector<2x16x4xf32> to vector<2x15x4xf32>
    %5 = vector.extract_strided_slice %0 {offsets = [0, 0, 0], sizes = [2, 1, 4], strides = [1, 1, 1]} : vector<2x16x4xf32> to vector<2x1x4xf32>
    %6 = tpu.concatenate %4, %5 in 1 : vector<2x15x4xf32>, vector<2x1x4xf32> -> vector<2x16x4xf32>
    %7 = tpu.concatenate %3, %0, %6 in 2 : vector<2x16x4xf32>, vector<2x16x4xf32>, vector<2x16x4xf32> -> vector<2x16x12xf32>
    %8 = vector.shape_cast %7 : vector<2x16x12xf32> to vector<32x12xf32>
    %c0_2 = arith.constant 0 : index
    %c0_3 = arith.constant 0 : index
    %9 = vector.load %arg2[%c0_2, %c0_3] : memref<12x32xf32, #tpu.memory_space<vmem>>, vector<12x32xf32>
    %cst = arith.constant dense<0.000000e+00> : vector<32x32xf32>
    %10 = tpu.matmul %8, %9, %cst {dimension_numbers = #tpu.dot_dimension_numbers<[1], [0], [0], [1], [0, 0, 1, 1], [], []>} : vector<32x12xf32>, vector<12x32xf32>, vector<32x32xf32> -> vector<32x32xf32>
    %cst_4 = arith.constant dense<0.000000e+00> : vector<32xf32>
    %11 = vector.multi_reduction <add>, %10, %cst_4 [0] : vector<32x32xf32> to vector<32xf32>
    %12 = vector.shape_cast %11 : vector<32xf32> to vector<1x32xf32>
    %13 = arith.mulf %10, %10 : vector<32x32xf32>
    %cst_5 = arith.constant dense<0.000000e+00> : vector<32xf32>
    %14 = vector.multi_reduction <add>, %13, %cst_5 [0] : vector<32x32xf32> to vector<32xf32>
    %15 = vector.shape_cast %14 : vector<32xf32> to vector<1x32xf32>
    %16 = vector.shape_cast %12 : vector<1x32xf32> to vector<1x32xf32>
    %17 = vector.broadcast %16 : vector<1x32xf32> to vector<8x32xf32>
    %c0_6 = arith.constant 0 : index
    %c0_7 = arith.constant 0 : index
    %c0_8 = arith.constant 0 : index
    %18 = vector.load %arg3[%c0_6, %c0_7, %c0_8] : memref<1x8x32xf32, #tpu.memory_space<vmem>>, vector<1x8x32xf32>
    %19 = vector.shape_cast %18 : vector<1x8x32xf32> to vector<8x32xf32>
    %20 = vector.shape_cast %17 : vector<8x32xf32> to vector<1x8x32xf32>
    tpu.vector_store %arg3[%c0_6, %c0_7, %c0_8], %20 {strides = array<i32>} : memref<1x8x32xf32, #tpu.memory_space<vmem>>, vector<1x8x32xf32>,
    %21 = vector.shape_cast %15 : vector<1x32xf32> to vector<1x32xf32>
    %22 = vector.broadcast %21 : vector<1x32xf32> to vector<8x32xf32>
    %c0_9 = arith.constant 0 : index
    %c0_10 = arith.constant 0 : index
    %c0_11 = arith.constant 0 : index
    %23 = vector.load %arg4[%c0_9, %c0_10, %c0_11] : memref<1x8x32xf32, #tpu.memory_space<vmem>>, vector<1x8x32xf32>
    %24 = vector.shape_cast %23 : vector<1x8x32xf32> to vector<8x32xf32>
    %25 = vector.shape_cast %22 : vector<8x32xf32> to vector<1x8x32xf32>
    tpu.vector_store %arg4[%c0_9, %c0_10, %c0_11], %25 {strides = array<i32>} : memref<1x8x32xf32, #tpu.memory_space<vmem>>, vector<1x8x32xf32>,
    return
  }
  func.func @transform_0(%arg0: i32) -> (i32, i32, i32) {
    %c0_i32 = arith.constant 0 : i32
    %c0_i32_0 = arith.constant 0 : i32
    %c0_i32_1 = arith.constant 0 : i32
    return %arg0, %c0_i32, %c0_i32_0 : i32, i32, i32
  }
  func.func @transform_1(%arg0: i32) -> (i32, i32) {
    %c0_i32 = arith.constant 0 : i32
    %c0_i32_0 = arith.constant 0 : i32
    %c0_i32_1 = arith.constant 0 : i32
    return %c0_i32, %c0_i32_0 : i32, i32
  }
  func.func @transform_2(%arg0: i32) -> (i32, i32, i32) {
    %c0_i32 = arith.constant 0 : i32
    %c0_i32_0 = arith.constant 0 : i32
    %c0_i32_1 = arith.constant 0 : i32
    return %arg0, %c0_i32, %c0_i32_0 : i32, i32, i32
  }
  func.func @transform_3(%arg0: i32) -> (i32, i32, i32) {
    %c0_i32 = arith.constant 0 : i32
    %c0_i32_0 = arith.constant 0 : i32
    %c0_i32_1 = arith.constant 0 : i32
    return %arg0, %c0_i32, %c0_i32_0 : i32, i32, i32
  }
}

</mosaic_0001>

<llo_original>
// kernel: tpu_custom_call.1
$region0: #{tpu_custom_call.1}
  #allocation0 [shape = 'u32[]', space=smem, size = 0x4, offset = 0x4, fixed_abs, tag = 'smem constant byte address 0x4 - core index']
  #allocation1 [shape = 'u32[72,128]{1,0:T(1,128)}', space=vmem, size = 0x9000, scoped, tag = 'internal scratch']
  %s0 = inlined_call_operand.vmem [shape: f32[2,16,4], index: 0, kind: input, shape index: {}]
  %s1 = inlined_call_operand.vmem [shape: f32[12,32], index: 1, kind: input, shape index: {}]
  %s2 = inlined_call_operand.hbm [shape: f32[1,8,32], index: 2, kind: output, shape index: {0}]
  %s3 = inlined_call_operand.hbm [shape: f32[1,8,32], index: 3, kind: output, shape index: {1}]
  %4 = xla_tuple %s2, %s3
  %s5 = sld [smem:[#allocation0]]
  $region26: #{tpu_custom_call.1} parent=0
    _
  %s7 = ssub.s32 1, %s5
  %s8 = scalar_select 0, %s7, %s5
  $region1: #{tpu_custom_call.1} parent=0
    #allocation2 [shape = 'u8[4096]{0}', space=vmem, size = 0x1000, scoped, tag = 'output window, operand 0, single buffered']
    #allocation3 [shape = 's32[1]{0}', space=sflag, size = 0x4, scoped, tag = 'scoped memory for tpu_custom_call.1']
    #allocation4 [shape = 'u8[4096]{0}', space=vmem, size = 0x1000, scoped, tag = 'output window, operand 1, single buffered']
    #allocation5 [shape = 's32[1]{0}', space=sflag, size = 0x4, scoped, tag = 'scoped memory for tpu_custom_call.1']
    %9 = vsyncpa [#allocation3], 0
    %10 = vsyncpa [#allocation5], 0
    // Predicated region
    $region2: #{tpu_custom_call.1} parent=1 // pred_check
      _
    $region3: #{tpu_custom_call.1} parent=1 // pred_check_branch
      %12 = sbr.rel (0) target = $region5
    $region4: #{tpu_custom_call.1} parent=1 // pred_region
      _
    $region5: #{tpu_custom_call.1} parent=1 // pred_fallthru
      _
    // Predicated region
    $region6: #{tpu_custom_call.1} parent=1 // pred_check
      _
    $region7: #{tpu_custom_call.1} parent=1 // pred_check_branch
      %14 = sbr.rel (0) target = $region9
    $region8: #{tpu_custom_call.1} parent=1 // pred_region
      _
    $region9: #{tpu_custom_call.1} parent=1 // pred_fallthru
      _
    %v15 = vld [vmem:[%s0] sm:$0xff]
    %v16 = vld [vmem:[%s0 + $0x8] sm:$0xff]
    %v17 = vld [vmem:[%s0 + $0x10] sm:$0xff]
    %v18 = vld [vmem:[%s0 + $0x18] sm:$0xff]
    %v21 = vrot.slane %v16, 7
    %v22 = vrot.slane %v18, 7
    %vm27 = vcmask 1040384
    %v28 = vrot.slane %v15, 7
    %v29 = vsel %vm27, %v28, %v21
    %v30 = vrot.slane %v17, 7
    %v31 = vsel %vm27, %v30, %v22
    %v36 = vsel %vm27, %v21, %v28
    %v37 = vsel %vm27, %v22, %v30
    %vm38 = vcmask 1046528
    %v39 = vrot.slane %v15, 1
    %v40 = vrot.slane %v16, 1
    %v41 = vsel %vm38, %v39, %v40
    %v42 = vrot.slane %v17, 1
    %v43 = vrot.slane %v18, 1
    %v44 = vsel %vm38, %v42, %v43
    %v49 = vsel %vm38, %v40, %v39
    %v50 = vsel %vm38, %v43, %v42
    %51 = vrot.lane.b32.xlu0 %v15, 4
    %v52 = vpop.permute.xlu0 %51
    %53 = vrot.lane.b32.xlu0 %v16, 4
    %v54 = vpop.permute.xlu0 %53
    %55 = vrot.lane.b32.xlu0 %v17, 4
    %v56 = vpop.permute.xlu0 %55
    %57 = vrot.lane.b32.xlu0 %v18, 4
    %v58 = vpop.permute.xlu0 %57
    %65 = vrot.lane.b32.xlu0 %v41, 8
    %v66 = vpop.permute.xlu0 %65
    %67 = vrot.lane.b32.xlu0 %v49, 8
    %v68 = vpop.permute.xlu0 %67
    %69 = vrot.lane.b32.xlu0 %v44, 8
    %v70 = vpop.permute.xlu0 %69
    %71 = vrot.lane.b32.xlu0 %v50, 8
    %v72 = vpop.permute.xlu0 %71
    %vm77 = vcmask 31744
    %v78 = vsel %vm77, %v36, %v52
    %v79 = vsel %vm77, %v29, %v54
    %v80 = vsel %vm77, %v37, %v56
    %v81 = vsel %vm77, %v31, %v58
    %vm82 = vcmask 64512
    %v83 = vsel %vm82, %v78, %v66
    %v84 = vsel %vm82, %v79, %v68
    %v85 = vsel %vm82, %v80, %v70
    %v86 = vsel %vm82, %v81, %v72
    %v87 = vld [vmem:[%s1] sm:$0xff]
    %v88 = vld [vmem:[%s1 + $0x8] sm:$0xf]
    %vm89 = vcmask 97280
    %v91 = vsel %vm89, %v83, 0
    %v94 = vsel %vm89, %v84, 0
    %v97 = vsel %vm89, %v85, 0
    %v100 = vsel %vm89, %v86, 0
    %vm102 = vcmask 1043456
    %v104 = vsel %vm102, %v88, 0
    %106 = vmatpush.msra.mxu0 0.0
    %107 = vmatpush.msra.mxu0 0.0
    %108 = vmatpush.msra.mxu0 0.0
    %109 = vmatpush.msra.mxu0 0.0
    %110 = vmatpush.msra.mxu0 0.0
    %111 = vmatpush.msra.mxu0 0.0
    %112 = vmatpush.msra.mxu0 0.0
    %113 = vmatpush.msra.mxu0 0.0
    %114 = vmatpush.msra.mxu0 0.0
    %115 = vmatpush.msra.mxu0 0.0
    %116 = vmatpush.msra.mxu0 0.0
    %117 = vmatpush.msra.mxu0 0.0
    %118 = vmatpush.msra.mxu0 0.0
    %119 = vmatpush.msra.mxu0 0.0
    %120 = vmatpush.msra.mxu0 %v104
    %121 = vmatpush.msra.mxu0 %v87
    %122 = vmatmul.f32.gmra.mxu0 %v91
    %v123 = vpop.f32.mrf.mxu0
    %v124 = vadd.f32 0.0, %v123
    %125 = vmatmul.f32.gmra.mxu0 %v94
    %v126 = vpop.f32.mrf.mxu0
    %v127 = vadd.f32 0.0, %v126
    %128 = vmatmul.f32.gmra.mxu0 %v97
    %v129 = vpop.f32.mrf.mxu0
    %v130 = vadd.f32 0.0, %v129
    %131 = vmatmul.f32.gmra.mxu0 %v100
    %v132 = vpop.f32.mrf.mxu0
    %v133 = vadd.f32 0.0, %v132
    %134 = vdwg.mxu0
    %vm135 = vcmask 261120
    %v136 = vsel %vm135, %v124, 0.0
    %v137 = vsel %vm135, %v127, 0.0
    %v138 = vadd.f32 %v136, %v137
    %v139 = vsel %vm135, %v130, 0.0
    %v140 = vadd.f32 %v138, %v139
    %v141 = vsel %vm135, %v133, 0.0
    %v142 = vadd.f32 %v140, %v141
    %v143 = vrot.slane %v142, 4
    %v144 = vadd.f32 %v142, %v143
    %v145 = vrot.slane %v144, 2
    %v146 = vadd.f32 %v144, %v145
    %v147 = vrot.slane %v146, 1
    %v148 = vadd.f32 %v146, %v147
    %v149 = vmul.f32 %v124, %v124
    %v150 = vmul.f32 %v127, %v127
    %v151 = vmul.f32 %v130, %v130
    %v152 = vmul.f32 %v133, %v133
    %v153 = vsel %vm135, %v149, 0.0
    %v154 = vsel %vm135, %v150, 0.0
    %v155 = vadd.f32 %v153, %v154
    %v156 = vsel %vm135, %v151, 0.0
    %v157 = vadd.f32 %v155, %v156
    %v158 = vsel %vm135, %v152, 0.0
    %v159 = vadd.f32 %v157, %v158
    %v160 = vrot.slane %v159, 4
    %v161 = vadd.f32 %v159, %v160
    %v162 = vrot.slane %v161, 2
    %v163 = vadd.f32 %v161, %v162
    %v164 = vrot.slane %v163, 1
    %v165 = vadd.f32 %v163, %v164
    %166 = vst.msk [vmem:[#allocation2] sm:$0xff] %vm135, %v148
    %167 = vst.msk [vmem:[#allocation4] sm:$0xff] %vm135, %v165
    // Predicated region
    $region10: #{tpu_custom_call.1} parent=1 // pred_check
      _
    $region11: #{tpu_custom_call.1} parent=1 // pred_check_branch
      %169 = sbr.rel (0) target = $region13
    $region12: #{tpu_custom_call.1} parent=1 // pred_region
      %171 = vsyncadd [#allocation3], 0
      %s173 = sshll.u32 [#allocation2], 4
      %s174 = int_to_ptr.vmem [resolvable:$true] %s173
      %s175 = sshll.u32 %s2, 4
      %s176 = int_to_ptr.hbm [resolvable:$true] %s175
      %178 = dma.vmem_to_hbm [thread:$0]  %s174, 128, %s176, [#allocation3]
    $region13: #{tpu_custom_call.1} parent=1 // pred_fallthru
      _
    // Predicated region
    $region14: #{tpu_custom_call.1} parent=1 // pred_check
      _
    $region15: #{tpu_custom_call.1} parent=1 // pred_check_branch
      %180 = sbr.rel (0) target = $region17
    $region16: #{tpu_custom_call.1} parent=1 // pred_region
      %182 = vsyncadd [#allocation5], 0
      %s184 = sshll.u32 [#allocation4], 4
      %s185 = int_to_ptr.vmem [resolvable:$true] %s184
      %s186 = sshll.u32 %s3, 4
      %s187 = int_to_ptr.hbm [resolvable:$true] %s186
      %189 = dma.vmem_to_hbm [thread:$0]  %s185, 128, %s187, [#allocation5]
    $region17: #{tpu_custom_call.1} parent=1 // pred_fallthru
      _
    // Predicated region
    $region18: #{tpu_custom_call.1} parent=1 // pred_check
      _
    $region19: #{tpu_custom_call.1} parent=1 // pred_check_branch
      %191 = sbr.rel (0) target = $region21
    $region20: #{tpu_custom_call.1} parent=1 // pred_region
      %193 = dma.done [#allocation3], 128
    $region21: #{tpu_custom_call.1} parent=1 // pred_fallthru
      _
    // Predicated region
    $region22: #{tpu_custom_call.1} parent=1 // pred_check
      _
    $region23: #{tpu_custom_call.1} parent=1 // pred_check_branch
      %195 = sbr.rel (0) target = $region25
    $region24: #{tpu_custom_call.1} parent=1 // pred_region
      %197 = dma.done [#allocation5], 128
    $region25: #{tpu_custom_call.1} parent=1 // pred_fallthru
      _
    %198 = vsyncpa [#allocation3], 1
    %199 = vsyncpa [#allocation5], 1

</llo_original>
